<compile_context>
chip_gen: v7x
topology: tpu7x:2x2x1
jax: 0.10.0
libtpu: 0.0.40
codegen_flags: <defaults>
</compile_context>

<pallas_src>
import functools

import jax
import jax.numpy as jnp
from jax import lax
from jax.experimental import pallas as pl
from jax.experimental.pallas import tpu as pltpu


def _round_up(x, m):
    return (x + m - 1) // m * m


def fold_linear_bn(w, b, gamma, beta, mean, var, eps=1e-5):
    """Fold an eval-mode BatchNorm1d into the preceding Linear."""
    scale = gamma / jnp.sqrt(var + eps)          # (C_out,)
    w_f = w * scale[:, None]                     # (C_out, C_in)
    b_f = (b - mean) * scale + beta              # (C_out,)
    return w_f, b_f[:, None]                     # bias as (C_out, 1) column


# ---------------------------------------------------------------------------
# Fused kernel: per-batch fc1 into scratch + three_nn + three_interpolate +
# fc2 branch + add.  One grid cell = one (batch, N2-tile).
# ---------------------------------------------------------------------------
def _fused_kernel(*refs, has_p2, mm_dtype, eps):
    if has_p2:
        (xyz2_ref, xyz1_ref, p1_ref, w1_ref, b1_ref,
         p2_ref, w2_ref, b2_ref, o_ref, feats_ref) = refs
    else:
        (xyz2_ref, xyz1_ref, p1_ref, w1_ref, b1_ref,
         o_ref, feats_ref) = refs

    # --- fc1 branch: computed ONCE per batch into VMEM scratch --------------
    @pl.when(pl.program_id(1) == 0)
    def _():
        y1 = jnp.dot(w1_ref[...].astype(mm_dtype), p1_ref[0].astype(mm_dtype),
                     preferred_element_type=jnp.float32)            # (C, N1)
        feats_ref[...] = jnp.maximum(y1 + b1_ref[...], 0.0).astype(
            feats_ref.dtype)

    xt = xyz2_ref[0]       # (3, TN2)  lane-dense target coords for this tile
    xs = xyz1_ref[0]       # (N1, 3)   source coords (resident per batch)
    N1 = xs.shape[0]
    TN2 = xt.shape[1]

    # --- pairwise squared distances, sources on sublanes / targets on lanes.
    # ||a-b||^2 = ||a||^2 + ||b||^2 - 2 a.b ; the cross term is a tiny K=3 MXU
    # matmul kept in f32 (bf16 here would corrupt neighbour selection).  Clamp
    # before sqrt guards cancellation; note the *ranking* of near-tied
    # neighbours can differ from an exact (a-b)^2 reference for point clouds
    # far from the origin (documented caveat).
    sq_s = jnp.sum(xs * xs, axis=1, keepdims=True)                   # (N1, 1)
    sq_t = jnp.sum(xt * xt, axis=0, keepdims=True)                   # (1, TN2)
    cross = jnp.dot(xs, xt, preferred_element_type=jnp.float32)      # (N1, TN2)
    d = jnp.maximum(sq_s + sq_t - 2.0 * cross, 0.0)

    BIG = jnp.float32(1e30)
    row = lax.broadcasted_iota(jnp.int32, (N1, TN2), 0)   # per-tile iota only

    # --- top-3 nearest sources per target column (lowest index wins ties),
    # accumulating the UN-normalised sparse weight matrix in (N1, TN2)
    # orientation so the interpolation matmul below is canonical (M,K)x(K,N).
    remaining = d
    wmat = jnp.zeros((N1, TN2), jnp.float32)
    norm = jnp.zeros((1, TN2), jnp.float32)
    for _ in range(3):
        m = jnp.min(remaining, axis=0, keepdims=True)                # (1, TN2)
        sel = jnp.min(jnp.where(remaining == m, row, N1),
                      axis=0, keepdims=True)                         # (1, TN2)
        hit = row == sel                            # single reused mask
        rf = 1.0 / (jnp.sqrt(m) + eps)              # 1/(L2+eps), (1, TN2)
        wmat = wmat + jnp.where(hit, rf, 0.0)
        norm = norm + rf
        remaining = jnp.where(hit, BIG, remaining)

    # --- inverse-distance interpolation on the MXU: (C, N1) @ (N1, TN2).
    fs = feats_ref[...]                             # (C, N1), bf16 by default
    interp = jnp.dot(fs, wmat.astype(fs.dtype),
                     preferred_element_type=jnp.float32)             # (C, TN2)
    # normalisation applied post-matmul: a (C, TN2) pass instead of (N1, TN2).
    interp = interp * (1.0 / norm)

    if has_p2:
        # fused fc2 branch: ReLU(W2 @ points2_tile + b2), weights resident.
        y2 = jnp.dot(w2_ref[...].astype(mm_dtype), p2_ref[0].astype(mm_dtype),
                     preferred_element_type=jnp.float32)             # (C, TN2)
        interp = interp + jnp.maximum(y2 + b2_ref[...], 0.0)

    o_ref[0] = interp.astype(o_ref.dtype)


# ---------------------------------------------------------------------------
# Wrapper: pad/transpose, fold BN, build grid + BlockSpecs.
# ---------------------------------------------------------------------------
def transition_up(xyz1, points1, xyz2, points2, params, *,
                  tile_n2=128, matmul_dtype=jnp.bfloat16, eps=1e-8,
                  vmem_limit_bytes=48 * 1024 * 1024):
    """xyz1:(B,N1,3) points1:(B,Clow,N1) xyz2:(B,N2,3) points2:(B,Chigh,N2)|None

    tile_n2: raise to 256-512 on v5e/v6e (128 MiB VMEM); 128 sized for v7x.
    matmul_dtype: operand dtype for the feature matmuls (f32 accumulate).
    """
    B, N1, _ = xyz1.shape
    C_low = points1.shape[1]
    N2 = xyz2.shape[1]
    if N1 < 3:
        raise ValueError("three_nn requires at least 3 source points (N1 >= 3)")

    w1f, b1f = fold_linear_bn(params["w1"], params["b1"], params["g1"],
                              params["be1"], params["m1"], params["v1"])
    C = w1f.shape[0]

    # lane-dense target coords: (B, 3, N2) so each tile block is (1, 3, tn2).
    xyz2_t = jnp.transpose(xyz2, (0, 2, 1))

    tn2 = min(tile_n2, _round_up(N2, 128))
    N2p = _round_up(N2, tn2)
    if N2p != N2:
        xyz2_t = jnp.pad(xyz2_t, ((0, 0), (0, 0), (0, N2p - N2)))
        if points2 is not None:
            points2 = jnp.pad(points2, ((0, 0), (0, 0), (0, N2p - N2)))

    has_p2 = points2 is not None
    kernel = functools.partial(_fused_kernel, has_p2=has_p2,
                               mm_dtype=matmul_dtype, eps=eps)

    in_specs = [
        pl.BlockSpec((1, 3, tn2), lambda b, t: (b, 0, t)),      # xyz2 tile
        pl.BlockSpec((1, N1, 3), lambda b, t: (b, 0, 0)),       # xyz1 resident
        pl.BlockSpec((1, C_low, N1), lambda b, t: (b, 0, 0)),   # points1 resident
        pl.BlockSpec((C, C_low), lambda b, t: (0, 0)),          # folded W1
        pl.BlockSpec((C, 1), lambda b, t: (0, 0)),              # folded b1
    ]
    args = [xyz2_t, xyz1, points1, w1f, b1f]
    if has_p2:
        C_high = points2.shape[1]
        w2f, b2f = fold_linear_bn(params["w2"], params["b2"], params["g2"],
                                  params["be2"], params["m2"], params["v2"])
        in_specs += [
            pl.BlockSpec((1, C_high, tn2), lambda b, t: (b, 0, t)),
            pl.BlockSpec((C, C_high), lambda b, t: (0, 0)),
            pl.BlockSpec((C, 1), lambda b, t: (0, 0)),
        ]
        args += [points2, w2f, b2f]

    out = pl.pallas_call(
        kernel,
        out_shape=jax.ShapeDtypeStruct((B, C, N2p), jnp.float32),
        grid=(B, N2p // tn2),
        in_specs=in_specs,
        out_specs=pl.BlockSpec((1, C, tn2), lambda b, t: (b, 0, t)),
        # feats1 scratch lives across the whole tile loop of each batch;
        # bf16 by default halves its VMEM footprint.
        scratch_shapes=[pltpu.VMEM((C, N1), matmul_dtype)],
        compiler_params=pltpu.CompilerParams(
            # tile axis must be "arbitrary": feats1 is (re)computed on the
            # first tile of each batch and reused by the following tiles.
            dimension_semantics=("parallel", "arbitrary"),
            vmem_limit_bytes=vmem_limit_bytes),
    )(*args)
    return out[:, :, :N2] if N2p != N2 else out


# ---------------------------------------------------------------------------
# Pure-JAX reference (for correctness check only)
# ---------------------------------------------------------------------------
def ref_forward(xyz1, points1, xyz2, points2, params):
    def fc(x, w, b):
        return jnp.maximum(jnp.einsum("oc,bcn->bon", w, x) + b[None], 0.0)

    w1f, b1f = fold_linear_bn(params["w1"], params["b1"], params["g1"],
                              params["be1"], params["m1"], params["v1"])
    f1 = fc(points1, w1f, b1f)

    d = jnp.sum((xyz2[:, :, None, :] - xyz1[:, None, :, :]) ** 2, axis=-1)
    negd, idx = lax.top_k(-d, 3)
    dist = jnp.sqrt(-negd)
    recip = 1.0 / (dist + 1e-8)
    weight = recip / jnp.sum(recip, axis=-1, keepdims=True)      # (B,N2,3)

    def interp_one(f, i, w):                                     # f (C,N1)
        g = f[:, i]                                              # (C,N2,3)
        return jnp.sum(g * w[None], axis=-1)                     # (C,N2)

    interp = jax.vmap(interp_one)(f1, idx, weight)
    if points2 is None:
        return interp
    w2f, b2f = fold_linear_bn(params["w2"], params["b2"], params["g2"],
                              params["be2"], params["m2"], params["v2"])
    return interp + fc(points2, w2f, b2f)


if __name__ == "__main__":
    B, N1, N2 = 2, 16, 64
    low_c, high_c, out_c = 16, 8, 32

    keys = jax.random.split(jax.random.PRNGKey(0), 16)
    xyz1 = jax.random.normal(keys[0], (B, N1, 3), jnp.float32)
    xyz2 = jax.random.normal(keys[1], (B, N2, 3), jnp.float32)
    points1 = jax.random.normal(keys[2], (B, low_c, N1), jnp.float32)
    points2 = jax.random.normal(keys[3], (B, high_c, N2), jnp.float32)

    params = dict(
        w1=0.1 * jax.random.normal(keys[4], (out_c, low_c), jnp.float32),
        b1=0.1 * jax.random.normal(keys[5], (out_c,), jnp.float32),
        g1=0.5 + jax.random.uniform(keys[6], (out_c,), jnp.float32),
        be1=0.1 * jax.random.normal(keys[7], (out_c,), jnp.float32),
        m1=0.1 * jax.random.normal(keys[8], (out_c,), jnp.float32),
        v1=0.5 + jax.random.uniform(keys[9], (out_c,), jnp.float32),
        w2=0.1 * jax.random.normal(keys[10], (out_c, high_c), jnp.float32),
        b2=0.1 * jax.random.normal(keys[11], (out_c,), jnp.float32),
        g2=0.5 + jax.random.uniform(keys[12], (out_c,), jnp.float32),
        be2=0.1 * jax.random.normal(keys[13], (out_c,), jnp.float32),
        m2=0.1 * jax.random.normal(keys[14], (out_c,), jnp.float32),
        v2=0.5 + jax.random.uniform(keys[15], (out_c,), jnp.float32),
    )

    ref = jax.block_until_ready(
        ref_forward(xyz1, points1, xyz2, points2, params))

    # 1) Default path: bf16 feature matmuls (MXU-native), f32 accumulation.
    out_bf16 = jax.block_until_ready(
        transition_up(xyz1, points1, xyz2, points2, params))
    assert out_bf16.shape == (B, out_c, N2), out_bf16.shape
    assert jnp.allclose(out_bf16, ref, rtol=5e-2, atol=5e-2), float(
        jnp.max(jnp.abs(out_bf16 - ref)))

    # 2) Strict check with f32 matmuls.
    out_f32 = jax.block_until_ready(
        transition_up(xyz1, points1, xyz2, points2, params,
                      matmul_dtype=jnp.float32))
    assert jnp.allclose(out_f32, ref, rtol=1e-3, atol=1e-3), float(
        jnp.max(jnp.abs(out_f32 - ref)))

    # 3) points2 is None path (no fc2 inputs at all -> no zero-tensor traffic).
    out_n = jax.block_until_ready(
        transition_up(xyz1, points1, xyz2, None, params,
                      matmul_dtype=jnp.float32))
    ref_n = jax.block_until_ready(
        ref_forward(xyz1, points1, xyz2, None, params))
    assert out_n.shape == (B, out_c, N2), out_n.shape
    assert jnp.allclose(out_n, ref_n, rtol=1e-3, atol=1e-3), float(
        jnp.max(jnp.abs(out_n - ref_n)))

    # 4) Multi-tile-per-batch path: exercises per-batch feats1 scratch reuse
    #    across N2 tiles (@pl.when init) and output padding/slicing.
    N1b, N2b = 48, 300
    xyz1b = jax.random.normal(keys[0], (B, N1b, 3), jnp.float32)
    xyz2b = jax.random.normal(keys[1], (B, N2b, 3), jnp.float32)
    points1b = jax.random.normal(keys[2], (B, low_c, N1b), jnp.float32)
    points2b = jax.random.normal(keys[3], (B, high_c, N2b), jnp.float32)
    out_b = jax.block_until_ready(
        transition_up(xyz1b, points1b, xyz2b, points2b, params,
                      matmul_dtype=jnp.float32))
    ref_b = jax.block_until_ready(
        ref_forward(xyz1b, points1b, xyz2b, points2b, params))
    assert out_b.shape == (B, out_c, N2b), out_b.shape
    assert jnp.allclose(out_b, ref_b, rtol=1e-3, atol=1e-3), float(
        jnp.max(jnp.abs(out_b - ref_b)))

    print("KERNEL_OK")
</pallas_src>

<mosaic_0001>
module attributes {stable_mosaic.version = 11 : i64} {
  func.func @_fused_kernel(%arg0: i32, %arg1: i32, %arg2: memref<1x3x128xf32, #tpu.memory_space<vmem>>, %arg3: memref<1x16x3xf32, #tpu.memory_space<vmem>>, %arg4: memref<1x16x16xf32, #tpu.memory_space<vmem>>, %arg5: memref<32x16xf32, #tpu.memory_space<vmem>>, %arg6: memref<32x1xf32, #tpu.memory_space<vmem>>, %arg7: memref<1x8x128xf32, #tpu.memory_space<vmem>>, %arg8: memref<32x8xf32, #tpu.memory_space<vmem>>, %arg9: memref<32x1xf32, #tpu.memory_space<vmem>>, %arg10: memref<1x32x128xf32, #tpu.memory_space<vmem>>, %arg11: memref<32x16xbf16, #tpu.memory_space<vmem>>) attributes {dimension_semantics = [#tpu.dimension_semantics<parallel>, #tpu.dimension_semantics<arbitrary>], iteration_bounds = array<i64: 2, 1>, scalar_prefetch = 0 : i64, scratch_operands = 1 : i64, tpu.core_type = #tpu.core_type<tc>, window_params = [{transform_indices = @transform_0, window_bounds = array<i64: 1, 3, 128>}, {transform_indices = @transform_1, window_bounds = array<i64: 1, 16, 3>}, {transform_indices = @transform_2, window_bounds = array<i64: 1, 16, 16>}, {pipeline_mode = #tpu.pipeline_mode<synchronous>, transform_indices = @transform_3, window_bounds = array<i64: 32, 16>}, {pipeline_mode = #tpu.pipeline_mode<synchronous>, transform_indices = @transform_4, window_bounds = array<i64: 32, 1>}, {transform_indices = @transform_5, window_bounds = array<i64: 1, 8, 128>}, {pipeline_mode = #tpu.pipeline_mode<synchronous>, transform_indices = @transform_6, window_bounds = array<i64: 32, 8>}, {pipeline_mode = #tpu.pipeline_mode<synchronous>, transform_indices = @transform_7, window_bounds = array<i64: 32, 1>}, {transform_indices = @transform_8, window_bounds = array<i64: 1, 32, 128>}]} {
    %c0_i32 = arith.constant 0 : i32
    %0 = arith.cmpi eq, %arg1, %c0_i32 : i32
    %1 = arith.extui %0 : i1 to i32
    %c0_i32_0 = arith.constant 0 : i32
    %2 = arith.cmpi ne, %1, %c0_i32_0 : i32
    scf.if %2 {
      %c0_47 = arith.constant 0 : index
      %c0_48 = arith.constant 0 : index
      %114 = vector.load %arg5[%c0_47, %c0_48] : memref<32x16xf32, #tpu.memory_space<vmem>>, vector<32x16xf32>
      %115 = arith.truncf %114 : vector<32x16xf32> to vector<32x16xbf16>
      %c0_49 = arith.constant 0 : index
      %c0_50 = arith.constant 0 : index
      %c0_51 = arith.constant 0 : index
      %116 = vector.load %arg4[%c0_49, %c0_50, %c0_51] : memref<1x16x16xf32, #tpu.memory_space<vmem>>, vector<1x16x16xf32>
      %117 = vector.shape_cast %116 : vector<1x16x16xf32> to vector<16x16xf32>
      %118 = arith.truncf %117 : vector<16x16xf32> to vector<16x16xbf16>
      %cst_52 = arith.constant dense<0.000000e+00> : vector<32x16xf32>
      %119 = tpu.matmul %115, %118, %cst_52 {dimension_numbers = #tpu.dot_dimension_numbers<[1], [0], [0], [1], [0, 0, 1, 1], [], []>} : vector<32x16xbf16>, vector<16x16xbf16>, vector<32x16xf32> -> vector<32x16xf32>
      %c0_53 = arith.constant 0 : index
      %c0_54 = arith.constant 0 : index
      %120 = vector.load %arg6[%c0_53, %c0_54] : memref<32x1xf32, #tpu.memory_space<vmem>>, vector<32x1xf32>
      %121 = vector.broadcast %120 : vector<32x1xf32> to vector<32x16xf32>
      %122 = arith.addf %119, %121 : vector<32x16xf32>
      %cst_55 = arith.constant 0.000000e+00 : f32
      %123 = vector.broadcast %cst_55 : f32 to vector<32x16xf32>
      %124 = arith.maximumf %122, %123 : vector<32x16xf32>
      %125 = arith.truncf %124 : vector<32x16xf32> to vector<32x16xbf16>
      %c0_56 = arith.constant 0 : index
      %c0_57 = arith.constant 0 : index
      %126 = vector.load %arg11[%c0_56, %c0_57] : memref<32x16xbf16, #tpu.memory_space<vmem>>, vector<32x16xbf16>
      tpu.vector_store %arg11[%c0_56, %c0_57], %125 {strides = array<i32>} : memref<32x16xbf16, #tpu.memory_space<vmem>>, vector<32x16xbf16>,
    } else {
    }
    %c0 = arith.constant 0 : index
    %c0_1 = arith.constant 0 : index
    %c0_2 = arith.constant 0 : index
    %3 = vector.load %arg2[%c0, %c0_1, %c0_2] : memref<1x3x128xf32, #tpu.memory_space<vmem>>, vector<1x3x128xf32>
    %4 = vector.shape_cast %3 : vector<1x3x128xf32> to vector<3x128xf32>
    %c0_3 = arith.constant 0 : index
    %c0_4 = arith.constant 0 : index
    %c0_5 = arith.constant 0 : index
    %5 = vector.load %arg3[%c0_3, %c0_4, %c0_5] : memref<1x16x3xf32, #tpu.memory_space<vmem>>, vector<1x16x3xf32>
    %6 = vector.shape_cast %5 : vector<1x16x3xf32> to vector<16x3xf32>
    %7 = arith.mulf %6, %6 : vector<16x3xf32>
    %cst = arith.constant dense<0.000000e+00> : vector<16xf32>
    %8 = vector.multi_reduction <add>, %7, %cst [1] : vector<16x3xf32> to vector<16xf32>
    %9 = vector.shape_cast %8 : vector<16xf32> to vector<16x1xf32>
    %10 = arith.mulf %4, %4 : vector<3x128xf32>
    %cst_6 = arith.constant dense<0.000000e+00> : vector<128xf32>
    %11 = vector.multi_reduction <add>, %10, %cst_6 [0] : vector<3x128xf32> to vector<128xf32>
    %12 = vector.shape_cast %11 : vector<128xf32> to vector<1x128xf32>
    %cst_7 = arith.constant dense<0.000000e+00> : vector<16x128xf32>
    %13 = tpu.matmul %6, %4, %cst_7 {dimension_numbers = #tpu.dot_dimension_numbers<[1], [0], [0], [1], [0, 0, 1, 1], [], []>} : vector<16x3xf32>, vector<3x128xf32>, vector<16x128xf32> -> vector<16x128xf32>
    %14 = vector.broadcast %9 : vector<16x1xf32> to vector<16x128xf32>
    %15 = vector.broadcast %12 : vector<1x128xf32> to vector<16x128xf32>
    %16 = arith.addf %14, %15 : vector<16x128xf32>
    %cst_8 = arith.constant 2.000000e+00 : f32
    %17 = vector.broadcast %cst_8 : f32 to vector<16x128xf32>
    %18 = arith.mulf %17, %13 : vector<16x128xf32>
    %19 = arith.subf %16, %18 : vector<16x128xf32>
    %cst_9 = arith.constant 0.000000e+00 : f32
    %20 = vector.broadcast %cst_9 : f32 to vector<16x128xf32>
    %21 = arith.maximumf %19, %20 : vector<16x128xf32>
    %22 = tpu.iota {dimensions = array<i32: 0>} : vector<16x128xi32>
    %cst_10 = arith.constant 0.000000e+00 : f32
    %23 = vector.broadcast %cst_10 : f32 to vector<16x128xf32>
    %cst_11 = arith.constant 0.000000e+00 : f32
    %24 = vector.broadcast %cst_11 : f32 to vector<1x128xf32>
    %cst_12 = arith.constant dense<0x7F800000> : vector<128xf32>
    %25 = vector.multi_reduction <minimumf>, %21, %cst_12 [0] : vector<16x128xf32> to vector<128xf32>
    %26 = vector.shape_cast %25 : vector<128xf32> to vector<1x128xf32>
    %27 = vector.broadcast %26 : vector<1x128xf32> to vector<16x128xf32>
    %28 = arith.cmpf oeq, %21, %27 : vector<16x128xf32>
    %c16_i32 = arith.constant 16 : i32
    %29 = vector.broadcast %c16_i32 : i32 to vector<16x128xi32>
    %30 = arith.select %28, %22, %29 : vector<16x128xi1>, vector<16x128xi32>
    %cst_13 = arith.constant dense<2147483647> : vector<128xi32>
    %31 = vector.multi_reduction <minsi>, %30, %cst_13 [0] : vector<16x128xi32> to vector<128xi32>
    %32 = vector.shape_cast %31 : vector<128xi32> to vector<1x128xi32>
    %33 = vector.broadcast %32 : vector<1x128xi32> to vector<16x128xi32>
    %34 = arith.cmpi eq, %22, %33 : vector<16x128xi32>
    %35 = math.sqrt %26 : vector<1x128xf32>
    %cst_14 = arith.constant 9.99999993E-9 : f32
    %36 = vector.broadcast %cst_14 : f32 to vector<1x128xf32>
    %37 = arith.addf %35, %36 : vector<1x128xf32>
    %cst_15 = arith.constant 1.000000e+00 : f32
    %38 = vector.broadcast %cst_15 : f32 to vector<1x128xf32>
    %39 = arith.divf %38, %37 : vector<1x128xf32>
    %cst_16 = arith.constant 0.000000e+00 : f32
    %40 = vector.shape_cast %39 : vector<1x128xf32> to vector<1x128xf32>
    %41 = vector.broadcast %40 : vector<1x128xf32> to vector<16x128xf32>
    %42 = vector.broadcast %cst_16 : f32 to vector<16x128xf32>
    %43 = arith.select %34, %41, %42 : vector<16x128xi1>, vector<16x128xf32>
    %44 = arith.addf %23, %43 : vector<16x128xf32>
    %45 = arith.addf %24, %39 : vector<1x128xf32>
    %cst_17 = arith.constant 1.000000e+30 : f32
    %46 = vector.broadcast %cst_17 : f32 to vector<16x128xf32>
    %47 = arith.select %34, %46, %21 : vector<16x128xi1>, vector<16x128xf32>
    %cst_18 = arith.constant dense<0x7F800000> : vector<128xf32>
    %48 = vector.multi_reduction <minimumf>, %47, %cst_18 [0] : vector<16x128xf32> to vector<128xf32>
    %49 = vector.shape_cast %48 : vector<128xf32> to vector<1x128xf32>
    %50 = vector.broadcast %49 : vector<1x128xf32> to vector<16x128xf32>
    %51 = arith.cmpf oeq, %47, %50 : vector<16x128xf32>
    %c16_i32_19 = arith.constant 16 : i32
    %52 = vector.broadcast %c16_i32_19 : i32 to vector<16x128xi32>
    %53 = arith.select %51, %22, %52 : vector<16x128xi1>, vector<16x128xi32>
    %cst_20 = arith.constant dense<2147483647> : vector<128xi32>
    %54 = vector.multi_reduction <minsi>, %53, %cst_20 [0] : vector<16x128xi32> to vector<128xi32>
    %55 = vector.shape_cast %54 : vector<128xi32> to vector<1x128xi32>
    %56 = vector.broadcast %55 : vector<1x128xi32> to vector<16x128xi32>
    %57 = arith.cmpi eq, %22, %56 : vector<16x128xi32>
    %58 = math.sqrt %49 : vector<1x128xf32>
    %cst_21 = arith.constant 9.99999993E-9 : f32
    %59 = vector.broadcast %cst_21 : f32 to vector<1x128xf32>
    %60 = arith.addf %58, %59 : vector<1x128xf32>
    %cst_22 = arith.constant 1.000000e+00 : f32
    %61 = vector.broadcast %cst_22 : f32 to vector<1x128xf32>
    %62 = arith.divf %61, %60 : vector<1x128xf32>
    %cst_23 = arith.constant 0.000000e+00 : f32
    %63 = vector.shape_cast %62 : vector<1x128xf32> to vector<1x128xf32>
    %64 = vector.broadcast %63 : vector<1x128xf32> to vector<16x128xf32>
    %65 = vector.broadcast %cst_23 : f32 to vector<16x128xf32>
    %66 = arith.select %57, %64, %65 : vector<16x128xi1>, vector<16x128xf32>
    %67 = arith.addf %44, %66 : vector<16x128xf32>
    %68 = arith.addf %45, %62 : vector<1x128xf32>
    %cst_24 = arith.constant 1.000000e+30 : f32
    %69 = vector.broadcast %cst_24 : f32 to vector<16x128xf32>
    %70 = arith.select %57, %69, %47 : vector<16x128xi1>, vector<16x128xf32>
    %cst_25 = arith.constant dense<0x7F800000> : vector<128xf32>
    %71 = vector.multi_reduction <minimumf>, %70, %cst_25 [0] : vector<16x128xf32> to vector<128xf32>
    %72 = vector.shape_cast %71 : vector<128xf32> to vector<1x128xf32>
    %73 = vector.broadcast %72 : vector<1x128xf32> to vector<16x128xf32>
    %74 = arith.cmpf oeq, %70, %73 : vector<16x128xf32>
    %c16_i32_26 = arith.constant 16 : i32
    %75 = vector.broadcast %c16_i32_26 : i32 to vector<16x128xi32>
    %76 = arith.select %74, %22, %75 : vector<16x128xi1>, vector<16x128xi32>
    %cst_27 = arith.constant dense<2147483647> : vector<128xi32>
    %77 = vector.multi_reduction <minsi>, %76, %cst_27 [0] : vector<16x128xi32> to vector<128xi32>
    %78 = vector.shape_cast %77 : vector<128xi32> to vector<1x128xi32>
    %79 = vector.broadcast %78 : vector<1x128xi32> to vector<16x128xi32>
    %80 = arith.cmpi eq, %22, %79 : vector<16x128xi32>
    %81 = math.sqrt %72 : vector<1x128xf32>
    %cst_28 = arith.constant 9.99999993E-9 : f32
    %82 = vector.broadcast %cst_28 : f32 to vector<1x128xf32>
    %83 = arith.addf %81, %82 : vector<1x128xf32>
    %cst_29 = arith.constant 1.000000e+00 : f32
    %84 = vector.broadcast %cst_29 : f32 to vector<1x128xf32>
    %85 = arith.divf %84, %83 : vector<1x128xf32>
    %cst_30 = arith.constant 0.000000e+00 : f32
    %86 = vector.shape_cast %85 : vector<1x128xf32> to vector<1x128xf32>
    %87 = vector.broadcast %86 : vector<1x128xf32> to vector<16x128xf32>
    %88 = vector.broadcast %cst_30 : f32 to vector<16x128xf32>
    %89 = arith.select %80, %87, %88 : vector<16x128xi1>, vector<16x128xf32>
    %90 = arith.addf %67, %89 : vector<16x128xf32>
    %91 = arith.addf %68, %85 : vector<1x128xf32>
    %c0_31 = arith.constant 0 : index
    %c0_32 = arith.constant 0 : index
    %92 = vector.load %arg11[%c0_31, %c0_32] : memref<32x16xbf16, #tpu.memory_space<vmem>>, vector<32x16xbf16>
    %93 = arith.truncf %90 : vector<16x128xf32> to vector<16x128xbf16>
    %cst_33 = arith.constant dense<0.000000e+00> : vector<32x128xf32>
    %94 = tpu.matmul %92, %93, %cst_33 {dimension_numbers = #tpu.dot_dimension_numbers<[1], [0], [0], [1], [0, 0, 1, 1], [], []>} : vector<32x16xbf16>, vector<16x128xbf16>, vector<32x128xf32> -> vector<32x128xf32>
    %cst_34 = arith.constant 1.000000e+00 : f32
    %95 = vector.broadcast %cst_34 : f32 to vector<1x128xf32>
    %96 = arith.divf %95, %91 : vector<1x128xf32>
    %97 = vector.broadcast %96 : vector<1x128xf32> to vector<32x128xf32>
    %98 = arith.mulf %94, %97 : vector<32x128xf32>
    %c0_35 = arith.constant 0 : index
    %c0_36 = arith.constant 0 : index
    %99 = vector.load %arg8[%c0_35, %c0_36] : memref<32x8xf32, #tpu.memory_space<vmem>>, vector<32x8xf32>
    %100 = arith.truncf %99 : vector<32x8xf32> to vector<32x8xbf16>
    %c0_37 = arith.constant 0 : index
    %c0_38 = arith.constant 0 : index
    %c0_39 = arith.constant 0 : index
    %101 = vector.load %arg7[%c0_37, %c0_38, %c0_39] : memref<1x8x128xf32, #tpu.memory_space<vmem>>, vector<1x8x128xf32>
    %102 = vector.shape_cast %101 : vector<1x8x128xf32> to vector<8x128xf32>
    %103 = arith.truncf %102 : vector<8x128xf32> to vector<8x128xbf16>
    %cst_40 = arith.constant dense<0.000000e+00> : vector<32x128xf32>
    %104 = tpu.matmul %100, %103, %cst_40 {dimension_numbers = #tpu.dot_dimension_numbers<[1], [0], [0], [1], [0, 0, 1, 1], [], []>} : vector<32x8xbf16>, vector<8x128xbf16>, vector<32x128xf32> -> vector<32x128xf32>
    %c0_41 = arith.constant 0 : index
    %c0_42 = arith.constant 0 : index
    %105 = vector.load %arg9[%c0_41, %c0_42] : memref<32x1xf32, #tpu.memory_space<vmem>>, vector<32x1xf32>
    %106 = vector.broadcast %105 : vector<32x1xf32> to vector<32x128xf32>
    %107 = arith.addf %104, %106 : vector<32x128xf32>
    %cst_43 = arith.constant 0.000000e+00 : f32
    %108 = vector.broadcast %cst_43 : f32 to vector<32x128xf32>
    %109 = arith.maximumf %107, %108 : vector<32x128xf32>
    %110 = arith.addf %98, %109 : vector<32x128xf32>
    %c0_44 = arith.constant 0 : index
    %c0_45 = arith.constant 0 : index
    %c0_46 = arith.constant 0 : index
    %111 = vector.load %arg10[%c0_44, %c0_45, %c0_46] : memref<1x32x128xf32, #tpu.memory_space<vmem>>, vector<1x32x128xf32>
    %112 = vector.shape_cast %111 : vector<1x32x128xf32> to vector<32x128xf32>
    %113 = vector.shape_cast %110 : vector<32x128xf32> to vector<1x32x128xf32>
    tpu.vector_store %arg10[%c0_44, %c0_45, %c0_46], %113 {strides = array<i32>} : memref<1x32x128xf32, #tpu.memory_space<vmem>>, vector<1x32x128xf32>,
    return
  }
  func.func @transform_0(%arg0: i32, %arg1: i32) -> (i32, i32, i32) {
    %c0_i32 = arith.constant 0 : i32
    %c0_i32_0 = arith.constant 0 : i32
    return %arg0, %c0_i32, %arg1 : i32, i32, i32
  }
  func.func @transform_1(%arg0: i32, %arg1: i32) -> (i32, i32, i32) {
    %c0_i32 = arith.constant 0 : i32
    %c0_i32_0 = arith.constant 0 : i32
    %c0_i32_1 = arith.constant 0 : i32
    return %arg0, %c0_i32, %c0_i32_0 : i32, i32, i32
  }
  func.func @transform_2(%arg0: i32, %arg1: i32) -> (i32, i32, i32) {
    %c0_i32 = arith.constant 0 : i32
    %c0_i32_0 = arith.constant 0 : i32
    %c0_i32_1 = arith.constant 0 : i32
    return %arg0, %c0_i32, %c0_i32_0 : i32, i32, i32
  }
  func.func @transform_3(%arg0: i32, %arg1: i32) -> (i32, i32) {
    %c0_i32 = arith.constant 0 : i32
    %c0_i32_0 = arith.constant 0 : i32
    %c0_i32_1 = arith.constant 0 : i32
    return %c0_i32, %c0_i32_0 : i32, i32
  }
  func.func @transform_4(%arg0: i32, %arg1: i32) -> (i32, i32) {
    %c0_i32 = arith.constant 0 : i32
    %c0_i32_0 = arith.constant 0 : i32
    %c0_i32_1 = arith.constant 0 : i32
    return %c0_i32, %c0_i32_0 : i32, i32
  }
  func.func @transform_5(%arg0: i32, %arg1: i32) -> (i32, i32, i32) {
    %c0_i32 = arith.constant 0 : i32
    %c0_i32_0 = arith.constant 0 : i32
    return %arg0, %c0_i32, %arg1 : i32, i32, i32
  }
  func.func @transform_6(%arg0: i32, %arg1: i32) -> (i32, i32) {
    %c0_i32 = arith.constant 0 : i32
    %c0_i32_0 = arith.constant 0 : i32
    %c0_i32_1 = arith.constant 0 : i32
    return %c0_i32, %c0_i32_0 : i32, i32
  }
  func.func @transform_7(%arg0: i32, %arg1: i32) -> (i32, i32) {
    %c0_i32 = arith.constant 0 : i32
    %c0_i32_0 = arith.constant 0 : i32
    %c0_i32_1 = arith.constant 0 : i32
    return %c0_i32, %c0_i32_0 : i32, i32
  }
  func.func @transform_8(%arg0: i32, %arg1: i32) -> (i32, i32, i32) {
    %c0_i32 = arith.constant 0 : i32
    %c0_i32_0 = arith.constant 0 : i32
    return %arg0, %c0_i32, %arg1 : i32, i32, i32
  }
}

</mosaic_0001>

<llo_original>
// kernel: tpu_custom_call.1
$region0: #{tpu_custom_call.1}
  #allocation0 [shape = 'u32[]', space=smem, size = 0x4, offset = 0x4, fixed_abs, tag = 'smem constant byte address 0x4 - core index']
  #allocation1 [shape = 'u32[144,128]{1,0:T(1,128)}', space=vmem, size = 0x12000, scoped, tag = 'internal scratch']
  #allocation2 [shape = 'bf16[32,16]{1,0:T(16,128)(2,1)}', space=vmem, size = 0x2000, scoped, tag = 'scratch operand']
  %s0 = inlined_call_operand.vmem [shape: f32[2,3,128], index: 0, kind: input, shape index: {}]
  %s1 = inlined_call_operand.vmem [shape: f32[2,16,3], index: 1, kind: input, shape index: {}]
  %s2 = inlined_call_operand.vmem [shape: f32[2,16,16], index: 2, kind: input, shape index: {}]
  %s3 = inlined_call_operand.vmem [shape: f32[32,16], index: 3, kind: input, shape index: {}]
  %s4 = inlined_call_operand.vmem [shape: f32[32,1], index: 4, kind: input, shape index: {}]
  %s5 = inlined_call_operand.vmem [shape: f32[2,8,128], index: 5, kind: input, shape index: {}]
  %s6 = inlined_call_operand.vmem [shape: f32[32,8], index: 6, kind: input, shape index: {}]
  %s7 = inlined_call_operand.vmem [shape: f32[32,1], index: 7, kind: input, shape index: {}]
  %s8 = inlined_call_operand.hbm [shape: f32[2,32,128], index: 8, kind: output, shape index: {}]
  %s9 = sld [smem:[#allocation0]]
  $region69: #{tpu_custom_call.1} parent=0
    _
  %s11 = ssub.s32 1, %s9
  %s12 = scalar_select 0, %s11, %s9
  $region1: #{tpu_custom_call.1} parent=0
    #allocation3 [shape = 'u8[32768]{0}', space=vmem, size = 0x8000, scoped, tag = 'output window, operand 0']
    #allocation4 [shape = 's32[2]{0}', space=sflag, size = 0x8, scoped, tag = 'scoped memory for tpu_custom_call.1']
    %13 = vsyncpa [#allocation4], 0
    %s14 = scalar_lea.sflag [#allocation4], 1
    %15 = vsyncpa %s14, 0
    loop: start=0, step=1, limit=4
    $region2: #{tpu_custom_call.1} parent=1 // loop_pre_header
      _
    $region3: #{tpu_custom_call.1} parent=1 // loop_header
      %s17 = sphi 0, %s21
      %p18 = scmp.ge.s32.totalorder %s17, 4
      %s24 = sphi 0, %s36
      %s25 = sphi 0, %s32
      %s26 = sphi 0, %s24
      %s27 = sphi 0, %s25
      %s28 = sphi 0, %s26
      %s29 = sphi 0, %s27
      %s41 = sphi 0, %s43
      %s44 = sphi 0, %s41
      %s45 = sphi 0, %s44
      %s61 = sphi 0, %s45
      %s67 = sphi 0, %s69
      %s70 = sphi 0, %s67
      %s71 = sphi 0, %s70
      %s87 = sphi 0, %s71
      %s93 = sphi 0, %s95
      %s96 = sphi 0, %s93
      %s97 = sphi 0, %s96
      %s113 = sphi 0, %s97
      %s117 = sphi 0, %s117
      %s119 = sphi 0, %s117
      %s120 = sphi 0, %s119
      %s134 = sphi 0, %s120
      %s138 = sphi 0, %s138
      %s140 = sphi 0, %s138
      %s141 = sphi 0, %s140
      %s155 = sphi 0, %s141
      %s163 = sphi 0, %s165
      %s166 = sphi 0, %s163
      %s167 = sphi 0, %s166
      %s183 = sphi 0, %s167
      %s187 = sphi 0, %s187
      %s189 = sphi 0, %s187
      %s190 = sphi 0, %s189
      %s204 = sphi 0, %s190
      %s208 = sphi 0, %s208
      %s210 = sphi 0, %s208
      %s211 = sphi 0, %s210
      %s225 = sphi 0, %s211
      %s233 = sphi 0, %s235
      %s236 = sphi 0, %s233
      %s237 = sphi 0, %s236
      %s253 = sphi 0, %s237
    $region4: #{tpu_custom_call.1} parent=1 // loop_header_branch
      %20 = sbr.rel (%p18) target = $region8
    $region5: #{tpu_custom_call.1} parent=1 // loop_body
      %s22 = ssub.s32 %s17, 1
      %s23 = ssub.s32 %s17, 2
      %s30 = sadd.s32 1, %s25
      %p31 = scmp.ge.s32.totalorder %s30, 1
      %s32 = scalar_select %p31, 0, %s30
      %s33 = sadd.s32 1, %s24
      %s34 = scalar_select %p31, %s33, %s24
      %p35 = scmp.ge.s32.totalorder %s34, 2
      %s36 = scalar_select %p35, 0, %s34
      %s37 = ssub.s32 %s24, %s36
      %s38 = ssub.s32 %s25, %s32
      %s39 = sor.u32 %s37, %s38
      %p40 = scmp.eq.s32.totalorder %s39, 0
      %s42 = sadd.s32 %s41, 1
      %s43 = scalar_select %p40, %s41, %s42
      %p46 = pneg %p40
      %p47 = scmp.eq.s32.totalorder %s17, 1
      %p48 = por %p46, %p47
      %p49 = scmp.ne.s32.totalorder %s41, %s44
      %p50 = scmp.eq.s32.totalorder %s17, 0
      %p51 = por %p49, %p50
      %p52 = scmp.ne.s32.totalorder %s41, %s44
      %p53 = scmp.eq.s32.totalorder %s22, 1
      %p54 = por %p52, %p53
      %p55 = scmp.ne.s32.totalorder %s44, %s45
      %p56 = scmp.eq.s32.totalorder %s22, 0
      %p57 = por %p55, %p56
      %p58 = scmp.ne.s32.totalorder %s44, %s45
      %p59 = scmp.eq.s32.totalorder %s23, 1
      %p60 = por %p58, %p59
      %p62 = scmp.ne.s32.totalorder %s45, %s61
      %p63 = scmp.eq.s32.totalorder %s23, 0
      %p64 = por %p62, %p63
      %s65 = ssub.s32 %s24, %s36
      %p66 = scmp.eq.s32.totalorder %s65, 0
      %s68 = sadd.s32 %s67, 1
      %s69 = scalar_select %p66, %s67, %s68
      %p72 = pneg %p66
      %p73 = scmp.eq.s32.totalorder %s17, 1
      %p74 = por %p72, %p73
      %p75 = scmp.ne.s32.totalorder %s67, %s70
      %p76 = scmp.eq.s32.totalorder %s17, 0
      %p77 = por %p75, %p76
      %p78 = scmp.ne.s32.totalorder %s67, %s70
      %p79 = scmp.eq.s32.totalorder %s22, 1
      %p80 = por %p78, %p79
      %p81 = scmp.ne.s32.totalorder %s70, %s71
      %p82 = scmp.eq.s32.totalorder %s22, 0
      %p83 = por %p81, %p82
      %p84 = scmp.ne.s32.totalorder %s70, %s71
      %p85 = scmp.eq.s32.totalorder %s23, 1
      %p86 = por %p84, %p85
      %p88 = scmp.ne.s32.totalorder %s71, %s87
      %p89 = scmp.eq.s32.totalorder %s23, 0
      %p90 = por %p88, %p89
      %s91 = ssub.s32 %s24, %s36
      %p92 = scmp.eq.s32.totalorder %s91, 0
      %s94 = sadd.s32 %s93, 1
      %s95 = scalar_select %p92, %s93, %s94
      %p98 = pneg %p92
      %p99 = scmp.eq.s32.totalorder %s17, 1
      %p100 = por %p98, %p99
      %p101 = scmp.ne.s32.totalorder %s93, %s96
      %p102 = scmp.eq.s32.totalorder %s17, 0
      %p103 = por %p101, %p102
      %p104 = scmp.ne.s32.totalorder %s93, %s96
      %p105 = scmp.eq.s32.totalorder %s22, 1
      %p106 = por %p104, %p105
      %p107 = scmp.ne.s32.totalorder %s96, %s97
      %p108 = scmp.eq.s32.totalorder %s22, 0
      %p109 = por %p107, %p108
      %p110 = scmp.ne.s32.totalorder %s96, %s97
      %p111 = scmp.eq.s32.totalorder %s23, 1
      %p112 = por %p110, %p111
      %p114 = scmp.ne.s32.totalorder %s97, %s113
      %p115 = scmp.eq.s32.totalorder %s23, 0
      %p116 = por %p114, %p115
      %s118 = sadd.s32 %s117, 1
      %p121 = scmp.eq.s32.totalorder %s17, 1
      %p122 = scmp.ne.s32.totalorder %s117, %s119
      %p123 = scmp.eq.s32.totalorder %s17, 0
      %p124 = por %p122, %p123
      %p125 = scmp.ne.s32.totalorder %s117, %s119
      %p126 = scmp.eq.s32.totalorder %s22, 1
      %p127 = por %p125, %p126
      %p128 = scmp.ne.s32.totalorder %s119, %s120
      %p129 = scmp.eq.s32.totalorder %s22, 0
      %p130 = por %p128, %p129
      %p131 = scmp.ne.s32.totalorder %s119, %s120
      %p132 = scmp.eq.s32.totalorder %s23, 1
      %p133 = por %p131, %p132
      %p135 = scmp.ne.s32.totalorder %s120, %s134
      %p136 = scmp.eq.s32.totalorder %s23, 0
      %p137 = por %p135, %p136
      %s139 = sadd.s32 %s138, 1
      %p142 = scmp.eq.s32.totalorder %s17, 1
      %p143 = scmp.ne.s32.totalorder %s138, %s140
      %p144 = scmp.eq.s32.totalorder %s17, 0
      %p145 = por %p143, %p144
      %p146 = scmp.ne.s32.totalorder %s138, %s140
      %p147 = scmp.eq.s32.totalorder %s22, 1
      %p148 = por %p146, %p147
      %p149 = scmp.ne.s32.totalorder %s140, %s141
      %p150 = scmp.eq.s32.totalorder %s22, 0
      %p151 = por %p149, %p150
      %p152 = scmp.ne.s32.totalorder %s140, %s141
      %p153 = scmp.eq.s32.totalorder %s23, 1
      %p154 = por %p152, %p153
      %p156 = scmp.ne.s32.totalorder %s141, %s155
      %p157 = scmp.eq.s32.totalorder %s23, 0
      %p158 = por %p156, %p157
      %s159 = ssub.s32 %s24, %s36
      %s160 = ssub.s32 %s25, %s32
      %s161 = sor.u32 %s159, %s160
      %p162 = scmp.eq.s32.totalorder %s161, 0
      %s164 = sadd.s32 %s163, 1
      %s165 = scalar_select %p162, %s163, %s164
      %p168 = pneg %p162
      %p169 = scmp.eq.s32.totalorder %s17, 1
      %p170 = por %p168, %p169
      %p171 = scmp.ne.s32.totalorder %s163, %s166
      %p172 = scmp.eq.s32.totalorder %s17, 0
      %p173 = por %p171, %p172
      %p174 = scmp.ne.s32.totalorder %s163, %s166
      %p175 = scmp.eq.s32.totalorder %s22, 1
      %p176 = por %p174, %p175
      %p177 = scmp.ne.s32.totalorder %s166, %s167
      %p178 = scmp.eq.s32.totalorder %s22, 0
      %p179 = por %p177, %p178
      %p180 = scmp.ne.s32.totalorder %s166, %s167
      %p181 = scmp.eq.s32.totalorder %s23, 1
      %p182 = por %p180, %p181
      %p184 = scmp.ne.s32.totalorder %s167, %s183
      %p185 = scmp.eq.s32.totalorder %s23, 0
      %p186 = por %p184, %p185
      %s188 = sadd.s32 %s187, 1
      %p191 = scmp.eq.s32.totalorder %s17, 1
      %p192 = scmp.ne.s32.totalorder %s187, %s189
      %p193 = scmp.eq.s32.totalorder %s17, 0
      %p194 = por %p192, %p193
      %p195 = scmp.ne.s32.totalorder %s187, %s189
      %p196 = scmp.eq.s32.totalorder %s22, 1
      %p197 = por %p195, %p196
      %p198 = scmp.ne.s32.totalorder %s189, %s190
      %p199 = scmp.eq.s32.totalorder %s22, 0
      %p200 = por %p198, %p199
      %p201 = scmp.ne.s32.totalorder %s189, %s190
      %p202 = scmp.eq.s32.totalorder %s23, 1
      %p203 = por %p201, %p202
      %p205 = scmp.ne.s32.totalorder %s190, %s204
      %p206 = scmp.eq.s32.totalorder %s23, 0
      %p207 = por %p205, %p206
      %s209 = sadd.s32 %s208, 1
      %p212 = scmp.eq.s32.totalorder %s17, 1
      %p213 = scmp.ne.s32.totalorder %s208, %s210
      %p214 = scmp.eq.s32.totalorder %s17, 0
      %p215 = por %p213, %p214
      %p216 = scmp.ne.s32.totalorder %s208, %s210
      %p217 = scmp.eq.s32.totalorder %s22, 1
      %p218 = por %p216, %p217
      %p219 = scmp.ne.s32.totalorder %s210, %s211
      %p220 = scmp.eq.s32.totalorder %s22, 0
      %p221 = por %p219, %p220
      %p222 = scmp.ne.s32.totalorder %s210, %s211
      %p223 = scmp.eq.s32.totalorder %s23, 1
      %p224 = por %p222, %p223
      %p226 = scmp.ne.s32.totalorder %s211, %s225
      %p227 = scmp.eq.s32.totalorder %s23, 0
      %p228 = por %p226, %p227
      %s229 = ssub.s32 %s24, %s36
      %s230 = ssub.s32 %s25, %s32
      %s231 = sor.u32 %s229, %s230
      %p232 = scmp.eq.s32.totalorder %s231, 0
      %s234 = sadd.s32 %s233, 1
      %s235 = scalar_select %p232, %s233, %s234
      %p238 = pneg %p232
      %p239 = scmp.eq.s32.totalorder %s17, 1
      %p240 = por %p238, %p239
      %p241 = scmp.ne.s32.totalorder %s233, %s236
      %p242 = scmp.eq.s32.totalorder %s17, 0
      %p243 = por %p241, %p242
      %p244 = scmp.ne.s32.totalorder %s233, %s236
      %p245 = scmp.eq.s32.totalorder %s22, 1
      %p246 = por %p244, %p245
      %p247 = scmp.ne.s32.totalorder %s236, %s237
      %p248 = scmp.eq.s32.totalorder %s22, 0
      %p249 = por %p247, %p248
      %p250 = scmp.ne.s32.totalorder %s236, %s237
      %p251 = scmp.eq.s32.totalorder %s23, 1
      %p252 = por %p250, %p251
      %p254 = scmp.ne.s32.totalorder %s237, %s253
      %p255 = scmp.eq.s32.totalorder %s23, 0
      %p256 = por %p254, %p255
      %p257 = scmp.le.s32.totalorder 1, %s17
      %p258 = scmp.lt.s32.totalorder %s17, 3
      %p259 = pnand %p257, %p258
      %p260 = pneg %p259
      // Predicated region
      $region9: #{tpu_custom_call.1} parent=5 // pred_check
        _
      $region10: #{tpu_custom_call.1} parent=5 // pred_check_branch
        %262 = sbr.rel (%p259) target = $region12
      $region11: #{tpu_custom_call.1} parent=5 // pred_region
        %s263 = ssub.s32 %s17, 1
        // Predicated region
        $region13: #{tpu_custom_call.1} parent=11 // pred_check
          %p264 = pneg %p130
        $region14: #{tpu_custom_call.1} parent=11 // pred_check_branch
          %266 = sbr.rel (%p264) target = $region16
        $region15: #{tpu_custom_call.1} parent=11 // pred_region
          _
        $region16: #{tpu_custom_call.1} parent=11 // pred_fallthru
          _
        // Predicated region
        $region17: #{tpu_custom_call.1} parent=11 // pred_check
          %p267 = pneg %p151
        $region18: #{tpu_custom_call.1} parent=11 // pred_check_branch
          %269 = sbr.rel (%p267) target = $region20
        $region19: #{tpu_custom_call.1} parent=11 // pred_region
          _
        $region20: #{tpu_custom_call.1} parent=11 // pred_fallthru
          _
        // Predicated region
        $region21: #{tpu_custom_call.1} parent=11 // pred_check
          %p270 = pneg %p200
        $region22: #{tpu_custom_call.1} parent=11 // pred_check_branch
          %272 = sbr.rel (%p270) target = $region24
        $region23: #{tpu_custom_call.1} parent=11 // pred_region
          _
        $region24: #{tpu_custom_call.1} parent=11 // pred_fallthru
          _
        // Predicated region
        $region25: #{tpu_custom_call.1} parent=11 // pred_check
          %p273 = pneg %p221
        $region26: #{tpu_custom_call.1} parent=11 // pred_check_branch
          %275 = sbr.rel (%p273) target = $region28
        $region27: #{tpu_custom_call.1} parent=11 // pred_region
          _
        $region28: #{tpu_custom_call.1} parent=11 // pred_fallthru
          _
      $region12: #{tpu_custom_call.1} parent=5 // pred_fallthru
        _
      %p276 = scmp.lt.s32.totalorder %s17, 2
      // Predicated region
      $region29: #{tpu_custom_call.1} parent=5 // pred_check
        %p277 = pneg %p276
      $region30: #{tpu_custom_call.1} parent=5 // pred_check_branch
        %279 = sbr.rel (%p277) target = $region32
      $region31: #{tpu_custom_call.1} parent=5 // pred_region
        // Predicated region
        $region33: #{tpu_custom_call.1} parent=31 // pred_check
          %p280 = pneg %p51
        $region34: #{tpu_custom_call.1} parent=31 // pred_check_branch
          %282 = sbr.rel (%p280) target = $region36
        $region35: #{tpu_custom_call.1} parent=31 // pred_region
          %p283 = scmp.lt.s32.totalorder %s24, 1
          %s284 = scalar_select %p283, %s24, 1
          %p285 = scmp.lt.s32.totalorder %s25, 0
          %s286 = scalar_select %p285, %s25, 0
          %s287 = sadd.s32 %s286, %s284
          %s288 = smul.addr %s287, 4
          %s289 = scalar_lea.vmem %s0, %s288
        $region36: #{tpu_custom_call.1} parent=31 // pred_fallthru
          _
        // Predicated region
        $region37: #{tpu_custom_call.1} parent=31 // pred_check
          %p290 = pneg %p77
        $region38: #{tpu_custom_call.1} parent=31 // pred_check_branch
          %292 = sbr.rel (%p290) target = $region40
        $region39: #{tpu_custom_call.1} parent=31 // pred_region
          %p293 = scmp.lt.s32.totalorder %s24, 1
          %s294 = scalar_select %p293, %s24, 1
          %s295 = smul.addr %s294, 2
          %s296 = smul.addr %s295, 8
          %s297 = scalar_lea.vmem %s1, %s296
        $region40: #{tpu_custom_call.1} parent=31 // pred_fallthru
          _
        // Predicated region
        $region41: #{tpu_custom_call.1} parent=31 // pred_check
          %p298 = pneg %p103
        $region42: #{tpu_custom_call.1} parent=31 // pred_check_branch
          %300 = sbr.rel (%p298) target = $region44
        $region43: #{tpu_custom_call.1} parent=31 // pred_region
          %p301 = scmp.lt.s32.totalorder %s24, 1
          %s302 = scalar_select %p301, %s24, 1
          %s303 = smul.addr %s302, 2
          %s304 = smul.addr %s303, 8
          %s305 = scalar_lea.vmem %s2, %s304
        $region44: #{tpu_custom_call.1} parent=31 // pred_fallthru
          _
        // Predicated region
        $region45: #{tpu_custom_call.1} parent=31 // pred_check
          %p306 = pneg %p173
        $region46: #{tpu_custom_call.1} parent=31 // pred_check_branch
          %308 = sbr.rel (%p306) target = $region48
        $region47: #{tpu_custom_call.1} parent=31 // pred_region
          %p309 = scmp.lt.s32.totalorder %s24, 1
          %s310 = scalar_select %p309, %s24, 1
          %p311 = scmp.lt.s32.totalorder %s25, 0
          %s312 = scalar_select %p311, %s25, 0
          %s313 = sadd.s32 %s312, %s310
          %s314 = smul.addr %s313, 8
          %s315 = scalar_lea.vmem %s5, %s314
        $region48: #{tpu_custom_call.1} parent=31 // pred_fallthru
          _
      $region32: #{tpu_custom_call.1} parent=5 // pred_fallthru
        _
      %p316 = scmp.le.s32.totalorder 1, %s17
      %p317 = scmp.lt.s32.totalorder %s17, 3
      %p318 = pnand %p316, %p317
      %p319 = pneg %p318
      // Predicated region
      $region49: #{tpu_custom_call.1} parent=5 // pred_check
        _
      $region50: #{tpu_custom_call.1} parent=5 // pred_check_branch
        %321 = sbr.rel (%p318) target = $region52
      $region51: #{tpu_custom_call.1} parent=5 // pred_region
        %s322 = ssub.s32 %s17, 1
        %p323 = scmp.lt.s32.totalorder %s26, 1
        %s324 = scalar_select %p323, %s26, 1
        %p325 = scmp.lt.s32.totalorder %s27, 0
        %s326 = scalar_select %p325, %s27, 0
        %s327 = sadd.s32 %s326, %s324
        %s328 = smul.addr %s327, 4
        %s329 = scalar_lea.vmem %s0, %s328
        %p330 = pneg %p57
        %p331 = pneg %p54
        %p332 = scmp.lt.s32.totalorder %s26, 1
        %s333 = scalar_select %p332, %s26, 1
        %s334 = smul.addr %s333, 2
        %s335 = smul.addr %s334, 8
        %s336 = scalar_lea.vmem %s1, %s335
        %p337 = pneg %p83
        %p338 = pneg %p80
        %p339 = scmp.lt.s32.totalorder %s26, 1
        %s340 = scalar_select %p339, %s26, 1
        %s341 = smul.addr %s340, 2
        %s342 = smul.addr %s341, 8
        %s343 = scalar_lea.vmem %s2, %s342
        %p344 = pneg %p109
        %p345 = pneg %p106
        %p346 = pneg %p130
        %p347 = pneg %p127
        %p348 = pneg %p151
        %p349 = pneg %p148
        %p350 = scmp.lt.s32.totalorder %s26, 1
        %s351 = scalar_select %p350, %s26, 1
        %p352 = scmp.lt.s32.totalorder %s27, 0
        %s353 = scalar_select %p352, %s27, 0
        %s354 = sadd.s32 %s353, %s351
        %s355 = smul.addr %s354, 8
        %s356 = scalar_lea.vmem %s5, %s355
        %p357 = pneg %p179
        %p358 = pneg %p176
        %p359 = pneg %p200
        %p360 = pneg %p197
        %p361 = pneg %p221
        %p362 = pneg %p218
        %p363 = pneg %p249
        %p364 = pneg %p246
        %s365 = sand.u32 %s236, 1
        %s366 = scalar_lea.sflag [#allocation4], %s365
        %s367 = sand.u32 %s236, 1
        %s368 = smul.addr %s367, 32
        %s369 = scalar_lea.vmem [#allocation3], %s368
        %p370 = scmp.lt.s32.totalorder %s26, 1
        %s371 = scalar_select %p370, %s26, 1
        %p372 = scmp.lt.s32.totalorder %s27, 0
        %s373 = scalar_select %p372, %s27, 0
        %s374 = sadd.s32 %s373, %s371
        %s375 = smul.addr %s374, 4
        %s376 = scalar_lea.vmem %s0, %s375
        %p377 = scmp.lt.s32.totalorder %s26, 1
        %s378 = scalar_select %p377, %s26, 1
        %s379 = smul.addr %s378, 2
        %s380 = smul.addr %s379, 8
        %s381 = scalar_lea.vmem %s1, %s380
        %p382 = scmp.lt.s32.totalorder %s26, 1
        %s383 = scalar_select %p382, %s26, 1
        %s384 = smul.addr %s383, 2
        %s385 = smul.addr %s384, 8
        %s386 = scalar_lea.vmem %s2, %s385
        %p387 = scmp.lt.s32.totalorder %s26, 1
        %s388 = scalar_select %p387, %s26, 1
        %p389 = scmp.lt.s32.totalorder %s27, 0
        %s390 = scalar_select %p389, %s27, 0
        %s391 = sadd.s32 %s390, %s388
        %s392 = smul.addr %s391, 8
        %s393 = scalar_lea.vmem %s5, %s392
        %p395 = scmp.eq.s32.totalorder %s27, 0
        // Predicated region
        $region53: #{tpu_custom_call.1} parent=51 // pred_check
          %p396 = pneg %p395
        $region54: #{tpu_custom_call.1} parent=51 // pred_check_branch
          %398 = sbr.rel (%p396) target = $region56
        $region55: #{tpu_custom_call.1} parent=51 // pred_region
          %v399 = vld [vmem:[%s3] sm:$0xff]
          %v400 = vld [vmem:[%s3 + $0x8] sm:$0xff]
          %v401 = vld [vmem:[%s3 + $0x10] sm:$0xff]
          %v402 = vld [vmem:[%s3 + $0x18] sm:$0xff]
          %v403 = vpack.c.bf16 %v400, %v399
          %v404 = vpack.c.bf16 %v402, %v401
          %v405 = vld [vmem:[%s386] sm:$0xff]
          %v406 = vld [vmem:[%s386 + $0x8] sm:$0xff]
          %v407 = vpack.c.bf16 %v406, %v405
          %v408 = vld [vmem:[%s4] sm:$0xff]
          %v409 = vld [vmem:[%s4 + $0x8] sm:$0xff]
          %v410 = vld [vmem:[%s4 + $0x10] sm:$0xff]
          %v411 = vld [vmem:[%s4 + $0x18] sm:$0xff]
          %413 = vset.pattern.permute.xlu0 0
          %414 = vperm.xlu0 %413, %v408
          %v415 = vpop.permute.xlu0 %414
          %418 = vset.pattern.permute.xlu0 0
          %419 = vperm.xlu0 %418, %v409
          %v420 = vpop.permute.xlu0 %419
          %423 = vset.pattern.permute.xlu0 0
          %424 = vperm.xlu0 %423, %v410
          %v425 = vpop.permute.xlu0 %424
          %428 = vset.pattern.permute.xlu0 0
          %429 = vperm.xlu0 %428, %v411
          %v430 = vpop.permute.xlu0 %429
          %vm432 = vcmask 130048
          %v434 = vsel %vm432, %v403, 0
          %v437 = vsel %vm432, %v404, 0
          %439 = vmatprep.subr.bf16.mxu0 0
          %440 = vmatpush1.bf16.msra.mxu0 %v407
          %441 = vmatprep.subr.bf16.mxu0 0
          %442 = vmatpush1.bf16.msra.mxu0 0
          %443 = vmatprep.subr.bf16.mxu0 0
          %444 = vmatpush1.bf16.msra.mxu0 0
          %445 = vmatprep.subr.bf16.mxu0 0
          %446 = vmatpush1.bf16.msra.mxu0 0
          %447 = vmatprep.subr.bf16.mxu0 0
          %448 = vmatpush1.bf16.msra.mxu0 0
          %449 = vmatprep.subr.bf16.mxu0 0
          %450 = vmatpush1.bf16.msra.mxu0 0
          %451 = vmatprep.subr.bf16.mxu0 0
          %452 = vmatpush1.bf16.msra.mxu0 0
          %453 = vmatprep.subr.bf16.mxu0 0
          %454 = vmatpush1.bf16.msra.mxu0 0
          %455 = vmatprep.subr.bf16.mxu0 0
          %456 = vmatpush1.bf16.msra.mxu0 0
          %457 = vmatprep.subr.bf16.mxu0 0
          %458 = vmatpush1.bf16.msra.mxu0 0
          %459 = vmatprep.subr.bf16.mxu0 0
          %460 = vmatpush1.bf16.msra.mxu0 0
          %461 = vmatprep.subr.bf16.mxu0 0
          %462 = vmatpush1.bf16.msra.mxu0 0
          %463 = vmatprep.subr.bf16.mxu0 0
          %464 = vmatpush1.bf16.msra.mxu0 0
          %465 = vmatprep.subr.bf16.mxu0 0
          %466 = vmatpush1.bf16.msra.mxu0 0
          %467 = vmatprep.subr.bf16.mxu0 0
          %468 = vmatpush1.bf16.msra.mxu0 0
          %469 = vmatprep.subr.bf16.mxu0 0
          %470 = vmatpush1.bf16.msra.mxu0 0
          %471 = vmatprep.mubr.bf16.mxu0 0
          %472 = vmatmul.mubr.bf16.gmra.mrb[0].mxu0 %v434
          %v473 = vpop.f32.mrb[0].mxu0
          %v474 = vadd.f32 %v415, %v473
          %v475 = vpop.f32.mrb[0].mxu0
          %v476 = vpop.f32.mrb[0].mxu0
          %v477 = vadd.f32 %v420, %v476
          %v478 = vpop.f32.mrb[0].mxu0
          %479 = vmatprep.mubr.bf16.mxu0 0
          %480 = vmatmul.mubr.bf16.gmra.mrb[0].mxu0 %v437
          %v481 = vpop.f32.mrb[0].mxu0
          %v482 = vadd.f32 %v425, %v481
          %v483 = vpop.f32.mrb[0].mxu0
          %v484 = vpop.f32.mrb[0].mxu0
          %v485 = vadd.f32 %v430, %v484
          %v486 = vpop.f32.mrb[0].mxu0
          %487 = vdwg.mxu0
          %v488 = vmax.f32 %v474, 0.0
          %v489 = vmax.f32 %v477, 0.0
          %v490 = vmax.f32 %v482, 0.0
          %v491 = vmax.f32 %v485, 0.0
          %v492 = vpack.c.bf16 %v489, %v488
          %v493 = vpack.c.bf16 %v491, %v490
          %494 = vst.msk [vmem:[#allocation2] sm:$0xff] %vm432, %v492
          %495 = vst.msk [vmem:[#allocation2 + $0x8] sm:$0xff] %vm432, %v493
        $region56: #{tpu_custom_call.1} parent=51 // pred_fallthru
          _
        %v496 = vld [vmem:[%s376] sm:$0x7]
        %v497 = vld [vmem:[%s381] sm:$0xff]
        %v498 = vld [vmem:[%s381 + $0x8] sm:$0xff]
        %v499 = vmul.f32 %v497, %v497
        %v500 = vmul.f32 %v498, %v498
        %vm501 = vcmask 23552
        %v502 = vsel %vm501, %v499, 0.0
        %503 = vadd.xlane.f32.xlu0 %v502
        %v504 = vpop.xlane.xlu0 %503
        %v505 = vsel %vm501, %v500, 0.0
        %506 = vadd.xlane.f32.xlu0 %v505
        %v507 = vpop.xlane.xlu0 %506
        %v508 = vmul.f32 %v496, %v496
        %vm509 = vcmask 1042432
        %v510 = vsel %vm509, %v508, 0.0
        %v511 = vrot.slane %v510, 4
        %v512 = vadd.f32 %v510, %v511
        %v513 = vrot.slane %v512, 2
        %v514 = vadd.f32 %v512, %v513
        %v515 = vrot.slane %v514, 1
        %v516 = vadd.f32 %v514, %v515
        %v518 = vsel %vm501, %v497, 0
        %v521 = vsel %vm501, %v498, 0
        %v524 = vsel %vm509, %v496, 0
        %526 = vmatprep.subr.mxu0 0.0
        %527 = vmatpush1.msra.mxu0 %v524
        %528 = vmatprep.subr.mxu0 0.0
        %529 = vmatpush1.msra.mxu0 0.0
        %530 = vmatprep.subr.mxu0 0.0
        %531 = vmatpush1.msra.mxu0 0.0
        %532 = vmatprep.subr.mxu0 0.0
        %533 = vmatpush1.msra.mxu0 0.0
        %534 = vmatprep.subr.mxu0 0.0
        %535 = vmatpush1.msra.mxu0 0.0
        %536 = vmatprep.subr.mxu0 0.0
        %537 = vmatpush1.msra.mxu0 0.0
        %538 = vmatprep.subr.mxu0 0.0
        %539 = vmatpush1.msra.mxu0 0.0
        %540 = vmatprep.subr.mxu0 0.0
        %541 = vmatpush1.msra.mxu0 0.0
        %542 = vmatprep.subr.mxu0 0.0
        %543 = vmatpush1.msra.mxu0 0.0
        %544 = vmatprep.subr.mxu0 0.0
        %545 = vmatpush1.msra.mxu0 0.0
        %546 = vmatprep.subr.mxu0 0.0
        %547 = vmatpush1.msra.mxu0 0.0
        %548 = vmatprep.subr.mxu0 0.0
        %549 = vmatpush1.msra.mxu0 0.0
        %550 = vmatprep.subr.mxu0 0.0
        %551 = vmatpush1.msra.mxu0 0.0
        %552 = vmatprep.subr.mxu0 0.0
        %553 = vmatpush1.msra.mxu0 0.0
        %554 = vmatprep.subr.mxu0 0.0
        %555 = vmatpush1.msra.mxu0 0.0
        %556 = vmatprep.subr.mxu0 0.0
        %557 = vmatpush1.msra.mxu0 0.0
        %558 = vmatprep.subr.mxu0 0.0
        %559 = vmatpush1.msra.mxu0 0.0
        %560 = vmatprep.subr.mxu0 0.0
        %561 = vmatpush1.msra.mxu0 0.0
        %562 = vmatprep.subr.mxu0 0.0
        %563 = vmatpush1.msra.mxu0 0.0
        %564 = vmatprep.subr.mxu0 0.0
        %565 = vmatpush1.msra.mxu0 0.0
        %566 = vmatprep.subr.mxu0 0.0
        %567 = vmatpush1.msra.mxu0 0.0
        %568 = vmatprep.subr.mxu0 0.0
        %569 = vmatpush1.msra.mxu0 0.0
        %570 = vmatprep.subr.mxu0 0.0
        %571 = vmatpush1.msra.mxu0 0.0
        %572 = vmatprep.subr.mxu0 0.0
        %573 = vmatpush1.msra.mxu0 0.0
        %574 = vmatprep.subr.mxu0 0.0
        %575 = vmatpush1.msra.mxu0 0.0
        %576 = vmatprep.subr.mxu0 0.0
        %577 = vmatpush1.msra.mxu0 0.0
        %578 = vmatprep.subr.mxu0 0.0
        %579 = vmatpush1.msra.mxu0 0.0
        %580 = vmatprep.subr.mxu0 0.0
        %581 = vmatpush1.msra.mxu0 0.0
        %582 = vmatprep.subr.mxu0 0.0
        %583 = vmatpush1.msra.mxu0 0.0
        %584 = vmatprep.subr.mxu0 0.0
        %585 = vmatpush1.msra.mxu0 0.0
        %586 = vmatprep.subr.mxu0 0.0
        %587 = vmatpush1.msra.mxu0 0.0
        %588 = vmatprep.subr.mxu0 0.0
        %589 = vmatpush1.msra.mxu0 0.0
        %590 = vmatprep.mubr.f32.mxu0 0.0
        %591 = vmatmul.mubr.f32.gmra.mrb[0].mxu0 %v518
        %v592 = vpop.f32.mrb[0].mxu0
        %v593 = vadd.f32 0.0, %v592
        %v594 = vpop.f32.mrb[0].mxu0
        %595 = vmatprep.mubr.f32.mxu0 0.0
        %596 = vmatmul.mubr.f32.gmra.mrb[0].mxu0 %v521
        %v597 = vpop.f32.mrb[0].mxu0
        %v598 = vadd.f32 0.0, %v597
        %v599 = vpop.f32.mrb[0].mxu0
        %600 = vdwg.mxu0
        %v601 = vadd.f32 %v504, %v516
        %v602 = vadd.f32 %v507, %v516
        %v603 = vmul.f32 %v593, 2.0
        %v604 = vmul.f32 %v598, 2.0
        %v605 = vsub.f32 %v601, %v603
        %v606 = vsub.f32 %v602, %v604
        %v607 = vmax.f32 %v605, 0.0
        %v608 = vmax.f32 %v606, 0.0
        %v609 = vlaneseq
        %v610 = vshrl.u32 %v609, 7
        %v611 = vadd.s32 %v610, 8
        %v612 = vmin.f32 %v607, %v608
        %v613 = vrot.slane %v612, 4
        %v614 = vmin.f32 %v612, %v613
        %v615 = vrot.slane %v614, 2
        %v616 = vmin.f32 %v614, %v615
        %v617 = vrot.slane %v616, 1
        %v618 = vmin.f32 %v616, %v617
        %vm619 = vcmp.eq.f32.partialorder %v607, %v618
        %vm620 = vcmp.eq.f32.partialorder %v608, %v618
        %v621 = vsel %vm619, %v610, 16
        %v622 = vsel %vm620, %v611, 16
        %vm623 = vcmp.lt.s32.totalorder %v621, %v622
        %v624 = vsel %vm623, %v621, %v622
        %v625 = vrot.slane %v624, 4
        %vm626 = vcmp.lt.s32.totalorder %v624, %v625
        %v627 = vsel %vm626, %v624, %v625
        %v628 = vrot.slane %v627, 2
        %vm629 = vcmp.lt.s32.totalorder %v627, %v628
        %v630 = vsel %vm629, %v627, %v628
        %v631 = vrot.slane %v630, 1
        %vm632 = vcmp.lt.s32.totalorder %v630, %v631
        %v633 = vsel %vm632, %v630, %v631
        %vm634 = vcmp.eq.s32.totalorder %v610, %v633
        %vm635 = vcmp.eq.s32.totalorder %v611, %v633
        %v636 = vrsqrt.pop %v618
        %v637 = vmul.f32 %v618, %v636
        %vm638 = vcmp.eq.f32.partialorder %v618, inf
        %v639 = vsel %vm638, %v618, %v637
        %vm640 = vcmp.eq.f32.partialorder %v618, 0.0
        %v641 = vand.u32 %v618, 2147483648
        %v642 = vsel %vm640, %v641, %v639
        %v643 = vadd.f32 %v642, 1e-08
        %v644 = vrcp.pop %v643
        %v645 = vmul.f32 1.0, %v644
        %v646 = vsel %vm634, %v645, 0.0
        %v647 = vsel %vm635, %v645, 0.0
        %v648 = vadd.f32 %v646, 0.0
        %v649 = vadd.f32 %v647, 0.0
        %v650 = vadd.f32 %v645, 0.0
        %v651 = vsel %vm634, 1e+30, %v607
        %v652 = vsel %vm635, 1e+30, %v608
        %v653 = vmin.f32 %v651, %v652
        %v654 = vrot.slane %v653, 4
        %v655 = vmin.f32 %v653, %v654
        %v656 = vrot.slane %v655, 2
        %v657 = vmin.f32 %v655, %v656
        %v658 = vrot.slane %v657, 1
        %v659 = vmin.f32 %v657, %v658
        %vm660 = vcmp.eq.f32.partialorder %v651, %v659
        %vm661 = vcmp.eq.f32.partialorder %v652, %v659
        %v662 = vsel %vm660, %v610, 16
        %v663 = vsel %vm661, %v611, 16
        %vm664 = vcmp.lt.s32.totalorder %v662, %v663
        %v665 = vsel %vm664, %v662, %v663
        %v666 = vrot.slane %v665, 4
        %vm667 = vcmp.lt.s32.totalorder %v665, %v666
        %v668 = vsel %vm667, %v665, %v666
        %v669 = vrot.slane %v668, 2
        %vm670 = vcmp.lt.s32.totalorder %v668, %v669
        %v671 = vsel %vm670, %v668, %v669
        %v672 = vrot.slane %v671, 1
        %vm673 = vcmp.lt.s32.totalorder %v671, %v672
        %v674 = vsel %vm673, %v671, %v672
        %vm675 = vcmp.eq.s32.totalorder %v610, %v674
        %vm676 = vcmp.eq.s32.totalorder %v611, %v674
        %v677 = vrsqrt.pop %v659
        %v678 = vmul.f32 %v659, %v677
        %vm679 = vcmp.eq.f32.partialorder %v659, inf
        %v680 = vsel %vm679, %v659, %v678
        %vm681 = vcmp.eq.f32.partialorder %v659, 0.0
        %v682 = vand.u32 %v659, 2147483648
        %v683 = vsel %vm681, %v682, %v680
        %v684 = vadd.f32 %v683, 1e-08
        %v685 = vrcp.pop %v684
        %v686 = vmul.f32 1.0, %v685
        %v687 = vsel %vm675, %v686, 0.0
        %v688 = vsel %vm676, %v686, 0.0
        %v689 = vadd.f32 %v648, %v687
        %v690 = vadd.f32 %v649, %v688
        %v691 = vadd.f32 %v650, %v686
        %v692 = vsel %vm675, 1e+30, %v651
        %v693 = vsel %vm676, 1e+30, %v652
        %v694 = vmin.f32 %v692, %v693
        %v695 = vrot.slane %v694, 4
        %v696 = vmin.f32 %v694, %v695
        %v697 = vrot.slane %v696, 2
        %v698 = vmin.f32 %v696, %v697
        %v699 = vrot.slane %v698, 1
        %v700 = vmin.f32 %v698, %v699
        %vm701 = vcmp.eq.f32.partialorder %v692, %v700
        %vm702 = vcmp.eq.f32.partialorder %v693, %v700
        %v703 = vsel %vm701, %v610, 16
        %v704 = vsel %vm702, %v611, 16
        %vm705 = vcmp.lt.s32.totalorder %v703, %v704
        %v706 = vsel %vm705, %v703, %v704
        %v707 = vrot.slane %v706, 4
        %vm708 = vcmp.lt.s32.totalorder %v706, %v707
        %v709 = vsel %vm708, %v706, %v707
        %v710 = vrot.slane %v709, 2
        %vm711 = vcmp.lt.s32.totalorder %v709, %v710
        %v712 = vsel %vm711, %v709, %v710
        %v713 = vrot.slane %v712, 1
        %vm714 = vcmp.lt.s32.totalorder %v712, %v713
        %v715 = vsel %vm714, %v712, %v713
        %vm716 = vcmp.eq.s32.totalorder %v610, %v715
        %vm717 = vcmp.eq.s32.totalorder %v611, %v715
        %v718 = vrsqrt.pop %v700
        %v719 = vmul.f32 %v700, %v718
        %vm720 = vcmp.eq.f32.partialorder %v700, inf
        %v721 = vsel %vm720, %v700, %v719
        %vm722 = vcmp.eq.f32.partialorder %v700, 0.0
        %v723 = vand.u32 %v700, 2147483648
        %v724 = vsel %vm722, %v723, %v721
        %v725 = vadd.f32 %v724, 1e-08
        %v726 = vrcp.pop %v725
        %v727 = vmul.f32 1.0, %v726
        %v728 = vsel %vm716, %v727, 0.0
        %v729 = vsel %vm717, %v727, 0.0
        %v730 = vadd.f32 %v689, %v728
        %v731 = vadd.f32 %v690, %v729
        %v732 = vadd.f32 %v691, %v727
        %v733 = vld [vmem:[#allocation2] sm:$0xff]
        %v734 = vld [vmem:[#allocation2 + $0x8] sm:$0xff]
        %v735 = vpack.c.bf16 %v731, %v730
        %vm736 = vcmask 130048
        %v738 = vsel %vm736, %v733, 0
        %v741 = vsel %vm736, %v734, 0
        %743 = vmatprep.subr.bf16.mxu0 0
        %744 = vmatpush1.bf16.msra.mxu0 %v735
        %745 = vmatprep.subr.bf16.mxu0 0
        %746 = vmatpush1.bf16.msra.mxu0 0
        %747 = vmatprep.subr.bf16.mxu0 0
        %748 = vmatpush1.bf16.msra.mxu0 0
        %749 = vmatprep.subr.bf16.mxu0 0
        %750 = vmatpush1.bf16.msra.mxu0 0
        %751 = vmatprep.subr.bf16.mxu0 0
        %752 = vmatpush1.bf16.msra.mxu0 0
        %753 = vmatprep.subr.bf16.mxu0 0
        %754 = vmatpush1.bf16.msra.mxu0 0
        %755 = vmatprep.subr.bf16.mxu0 0
        %756 = vmatpush1.bf16.msra.mxu0 0
        %757 = vmatprep.subr.bf16.mxu0 0
        %758 = vmatpush1.bf16.msra.mxu0 0
        %759 = vmatprep.subr.bf16.mxu0 0
        %760 = vmatpush1.bf16.msra.mxu0 0
        %761 = vmatprep.subr.bf16.mxu0 0
        %762 = vmatpush1.bf16.msra.mxu0 0
        %763 = vmatprep.subr.bf16.mxu0 0
        %764 = vmatpush1.bf16.msra.mxu0 0
        %765 = vmatprep.subr.bf16.mxu0 0
        %766 = vmatpush1.bf16.msra.mxu0 0
        %767 = vmatprep.subr.bf16.mxu0 0
        %768 = vmatpush1.bf16.msra.mxu0 0
        %769 = vmatprep.subr.bf16.mxu0 0
        %770 = vmatpush1.bf16.msra.mxu0 0
        %771 = vmatprep.subr.bf16.mxu0 0
        %772 = vmatpush1.bf16.msra.mxu0 0
        %773 = vmatprep.subr.bf16.mxu0 0
        %774 = vmatpush1.bf16.msra.mxu0 0
        %775 = vmatprep.mubr.bf16.mxu0 0
        %776 = vmatmul.mubr.bf16.gmra.mrb[0].mxu0 %v738
        %v777 = vpop.f32.mrb[0].mxu0
        %v778 = vadd.f32 0.0, %v777
        %v779 = vpop.f32.mrb[0].mxu0
        %v780 = vpop.f32.mrb[0].mxu0
        %v781 = vadd.f32 0.0, %v780
        %v782 = vpop.f32.mrb[0].mxu0
        %783 = vmatprep.mubr.bf16.mxu0 0
        %784 = vmatmul.mubr.bf16.gmra.mrb[0].mxu0 %v741
        %v785 = vpop.f32.mrb[0].mxu0
        %v786 = vadd.f32 0.0, %v785
        %v787 = vpop.f32.mrb[0].mxu0
        %v788 = vpop.f32.mrb[0].mxu0
        %v789 = vadd.f32 0.0, %v788
        %v790 = vpop.f32.mrb[0].mxu0
        %791 = vdwg.mxu0
        %v792 = vrcp.pop %v732
        %v793 = vmul.f32 1.0, %v792
        %v794 = vmul.f32 %v778, %v793
        %v795 = vmul.f32 %v781, %v793
        %v796 = vmul.f32 %v786, %v793
        %v797 = vmul.f32 %v789, %v793
        %v798 = vld [vmem:[%s6] sm:$0xff]
        %v799 = vld [vmem:[%s6 + $0x8] sm:$0xff]
        %v800 = vld [vmem:[%s6 + $0x10] sm:$0xff]
        %v801 = vld [vmem:[%s6 + $0x18] sm:$0xff]
        %v802 = vpack.c.bf16 %v799, %v798
        %v803 = vpack.c.bf16 %v801, %v800
        %v804 = vld [vmem:[%s393] sm:$0xff]
        %v805 = vpack.c.bf16 %v804, %v804
        %v806 = vld [vmem:[%s7] sm:$0xff]
        %v807 = vld [vmem:[%s7 + $0x8] sm:$0xff]
        %v808 = vld [vmem:[%s7 + $0x10] sm:$0xff]
        %v809 = vld [vmem:[%s7 + $0x18] sm:$0xff]
        %811 = vset.pattern.permute.xlu0 0
        %812 = vperm.xlu0 %811, %v806
        %v813 = vpop.permute.xlu0 %812
        %816 = vset.pattern.permute.xlu0 0
        %817 = vperm.xlu0 %816, %v807
        %v818 = vpop.permute.xlu0 %817
        %821 = vset.pattern.permute.xlu0 0
        %822 = vperm.xlu0 %821, %v808
        %v823 = vpop.permute.xlu0 %822
        %826 = vset.pattern.permute.xlu0 0
        %827 = vperm.xlu0 %826, %v809
        %v828 = vpop.permute.xlu0 %827
        %vm830 = vcmask 64512
        %v832 = vsel %vm830, %v802, 0
        %v835 = vsel %vm830, %v803, 0
        %vm837 = vcmask 1043456
        %v839 = vsel %vm837, %v805, 0
        %841 = vmatprep.subr.bf16.mxu0 0
        %842 = vmatpush1.bf16.msra.mxu0 %v839
        %843 = vmatprep.subr.bf16.mxu0 0
        %844 = vmatpush1.bf16.msra.mxu0 0
        %845 = vmatprep.subr.bf16.mxu0 0
        %846 = vmatpush1.bf16.msra.mxu0 0
        %847 = vmatprep.subr.bf16.mxu0 0
        %848 = vmatpush1.bf16.msra.mxu0 0
        %849 = vmatprep.subr.bf16.mxu0 0
        %850 = vmatpush1.bf16.msra.mxu0 0
        %851 = vmatprep.subr.bf16.mxu0 0
        %852 = vmatpush1.bf16.msra.mxu0 0
        %853 = vmatprep.subr.bf16.mxu0 0
        %854 = vmatpush1.bf16.msra.mxu0 0
        %855 = vmatprep.subr.bf16.mxu0 0
        %856 = vmatpush1.bf16.msra.mxu0 0
        %857 = vmatprep.subr.bf16.mxu0 0
        %858 = vmatpush1.bf16.msra.mxu0 0
        %859 = vmatprep.subr.bf16.mxu0 0
        %860 = vmatpush1.bf16.msra.mxu0 0
        %861 = vmatprep.subr.bf16.mxu0 0
        %862 = vmatpush1.bf16.msra.mxu0 0
        %863 = vmatprep.subr.bf16.mxu0 0
        %864 = vmatpush1.bf16.msra.mxu0 0
        %865 = vmatprep.subr.bf16.mxu0 0
        %866 = vmatpush1.bf16.msra.mxu0 0
        %867 = vmatprep.subr.bf16.mxu0 0
        %868 = vmatpush1.bf16.msra.mxu0 0
        %869 = vmatprep.subr.bf16.mxu0 0
        %870 = vmatpush1.bf16.msra.mxu0 0
        %871 = vmatprep.subr.bf16.mxu0 0
        %872 = vmatpush1.bf16.msra.mxu0 0
        %873 = vmatprep.mubr.bf16.mxu0 0
        %874 = vmatmul.mubr.bf16.gmra.mrb[0].mxu0 %v832
        %v875 = vpop.f32.mrb[0].mxu0
        %v876 = vadd.f32 %v813, %v875
        %v877 = vpop.f32.mrb[0].mxu0
        %v878 = vpop.f32.mrb[0].mxu0
        %v879 = vadd.f32 %v818, %v878
        %v880 = vpop.f32.mrb[0].mxu0
        %881 = vmatprep.mubr.bf16.mxu0 0
        %882 = vmatmul.mubr.bf16.gmra.mrb[0].mxu0 %v835
        %v883 = vpop.f32.mrb[0].mxu0
        %v884 = vadd.f32 %v823, %v883
        %v885 = vpop.f32.mrb[0].mxu0
        %v886 = vpop.f32.mrb[0].mxu0
        %v887 = vadd.f32 %v828, %v886
        %v888 = vpop.f32.mrb[0].mxu0
        %889 = vdwg.mxu0
        %v890 = vmax.f32 %v876, 0.0
        %v891 = vmax.f32 %v879, 0.0
        %v892 = vmax.f32 %v884, 0.0
        %v893 = vmax.f32 %v887, 0.0
        %v894 = vadd.f32 %v794, %v890
        %v895 = vadd.f32 %v795, %v891
        %v896 = vadd.f32 %v796, %v892
        %v897 = vadd.f32 %v797, %v893
        %898 = vst [vmem:[%s369] sm:$0xff] %v894
        %899 = vst [vmem:[%s369 + $0x8] sm:$0xff] %v895
        %900 = vst [vmem:[%s369 + $0x10] sm:$0xff] %v896
        %901 = vst [vmem:[%s369 + $0x18] sm:$0xff] %v897
        %s902 = sand.u32 %s236, 1
        %s903 = scalar_lea.sflag [#allocation4], %s902
        %s904 = sand.u32 %s236, 1
        %s905 = smul.addr %s904, 32
        %s906 = scalar_lea.vmem [#allocation3], %s905
        // Predicated region
        $region57: #{tpu_custom_call.1} parent=51 // pred_check
          %p907 = pneg %p246
        $region58: #{tpu_custom_call.1} parent=51 // pred_check_branch
          %909 = sbr.rel (%p907) target = $region60
        $region59: #{tpu_custom_call.1} parent=51 // pred_region
          %s911 = ssub.s32 512, 512
          %912 = vsyncadd %s903, %s911
          %s913 = smul.addr %s26, 4
          %s914 = sadd.s32 %s27, %s913
          %s915 = smul.addr %s914, 128
          %s916 = scalar_lea.hbm %s8, %s915
          %s917 = sshll.u32 %s906, 4
          %s918 = int_to_ptr.vmem [resolvable:$true] %s917
          %923 = dma.vmem_to_hbm [thread:$0]  %s918, 512, %s916, %s903, 128, 128, 8
        $region60: #{tpu_custom_call.1} parent=51 // pred_fallthru
          _
      $region52: #{tpu_custom_call.1} parent=5 // pred_fallthru
        _
      %p924 = scmp.le.s32.totalorder 2, %s17
      // Predicated region
      $region61: #{tpu_custom_call.1} parent=5 // pred_check
        %p925 = pneg %p924
      $region62: #{tpu_custom_call.1} parent=5 // pred_check_branch
        %927 = sbr.rel (%p925) target = $region64
      $region63: #{tpu_custom_call.1} parent=5 // pred_region
        %s928 = ssub.s32 %s17, 2
        // Predicated region
        $region65: #{tpu_custom_call.1} parent=63 // pred_check
          %p929 = pneg %p252
        $region66: #{tpu_custom_call.1} parent=63 // pred_check_branch
          %931 = sbr.rel (%p929) target = $region68
        $region67: #{tpu_custom_call.1} parent=63 // pred_region
          %s932 = sand.u32 %s237, 1
          %s933 = scalar_lea.sflag [#allocation4], %s932
          %s934 = sand.u32 %s237, 1
          %s935 = smul.addr %s934, 32
          %s936 = scalar_lea.vmem [#allocation3], %s935
          %937 = dma.done %s933, 512
        $region68: #{tpu_custom_call.1} parent=63 // pred_fallthru
          _
      $region64: #{tpu_custom_call.1} parent=5 // pred_fallthru
        _
    $region6: #{tpu_custom_call.1} parent=1 // loop_footer
      %s21 = sadd.s32 1, %s17
    $region7: #{tpu_custom_call.1} parent=1 // loop_footer_branch
      %16 = sbr.rel target = $region3
    $region8: #{tpu_custom_call.1} parent=1 // loop_exit
      _
    %938 = vsyncpa [#allocation4], 1
    %s939 = scalar_lea.sflag [#allocation4], 1
    %940 = vsyncpa %s939, 1

</llo_original>
